<compile_context>
chip_gen: v5e
topology: v5e:2x2
jax: 0.10.0
libtpu: 0.0.40
codegen_flags: <defaults>
</compile_context>

<pallas_src>
import functools

import jax
import jax.numpy as jnp
from jax.experimental import pallas as pl
from jax.experimental.pallas import tpu as pltpu

_LANE = 128
_SUBLANE = 8
_MAX_UNTILED_K = 2048  # K <= this: single full-K block, no padding of x or W.


def _round_up(x, m):
    return (x + m - 1) // m * m


def _pick_divisor_tile(padded, candidates, fallback):
    for c in candidates:
        if padded % c == 0:
            return c
    return fallback


@functools.lru_cache(maxsize=1)
def _vmem_capacity_bytes():
    """Physical per-core VMEM (128 MiB v5e/v6e, 64 MiB v7x). Conservative fallback."""
    try:
        info = pltpu.get_tpu_info()
        for name in ("vmem_capacity_bytes", "vmem_size_bytes", "vmem_bytes"):
            cap = getattr(info, name, None)
            if cap and (32 << 20) <= int(cap) <= (256 << 20):
                return int(cap)
    except Exception:
        pass
    return 64 << 20  # safe on every generation


def _vmem_budget_bytes():
    # Keep the kernel's resident working set to <= half of physical VMEM so
    # the compiler retains room for pipelining / internal scratch.
    return max(_vmem_capacity_bytes() // 2, 24 << 20)


def _vmem_limit_bytes(usage):
    cap = _vmem_capacity_bytes()
    return int(min(cap - (2 << 20), max(usage * 3 // 2 + (2 << 20), 32 << 20)))


# ---------------------------------------------------------------------------
# Kernel bodies.
#   a_ref   : (T_rows, tk)            (left operand, any float dtype)
#   b_ref   : (tk, T_cols)            (right operand, any float dtype)
#   bias_ref: (1, T_cols) or (T_rows, 1)  f32 (broadcasts against the result)
#   o_ref   : (T_rows, T_cols)
# ---------------------------------------------------------------------------
def _matmul_bias_acc_kernel(a_ref, b_ref, bias_ref, o_ref, acc_ref, *, k_axis,
                            compute_dtype):
    """Tiled-K path: f32 VMEM accumulator, bias folded into the k==0 init."""
    k = pl.program_id(k_axis)

    @pl.when(k == 0)
    def _init():
        acc_ref[...] = jnp.broadcast_to(
            bias_ref[...].astype(jnp.float32), acc_ref.shape)

    acc_ref[...] += jnp.dot(
        a_ref[...].astype(compute_dtype),     # in-kernel cast (no host pass)
        b_ref[...].astype(compute_dtype),
        preferred_element_type=jnp.float32)

    @pl.when(k == pl.num_programs(k_axis) - 1)
    def _store():
        o_ref[...] = acc_ref[...].astype(o_ref.dtype)


def _matmul_bias_single_kernel(a_ref, b_ref, bias_ref, o_ref, *, compute_dtype):
    """Single-K-step specialization: no accumulator scratch, direct store."""
    acc = jnp.dot(
        a_ref[...].astype(compute_dtype),
        b_ref[...].astype(compute_dtype),
        preferred_element_type=jnp.float32)
    o_ref[...] = (acc + bias_ref[...].astype(jnp.float32)).astype(o_ref.dtype)


def _k_tiling(K):
    if K <= _MAX_UNTILED_K:
        return K, K
    Kp = _round_up(K, _LANE)
    # Large K tiles amortize the f32 accumulator read-modify-write (vst slot).
    tk = _pick_divisor_tile(Kp, (2048, 1024, 512), _LANE)
    return tk, Kp


# ---------------------------------------------------------------------------
# feature_dim == -1 : y[M, N] = x2d[M, K] @ W^T[K, N] + b
# ---------------------------------------------------------------------------
def _linear_forward(x2d, weight, bias, out_dtype, compute_dtype):
    M, K = x2d.shape
    N = weight.shape[0]
    x_bytes = jnp.dtype(x2d.dtype).itemsize
    w_bytes = jnp.dtype(compute_dtype).itemsize
    out_bytes = jnp.dtype(out_dtype).itemsize

    tk, Kp = _k_tiling(K)
    gk = Kp // tk

    # N tiling (lane axis of the output): no padding, last block may be partial
    # (masked stores).  tn >= 256 keeps the 2x256 MXU (v6e/v7x) full.
    if N <= 256:
        tn = N                      # full-dim block handles unaligned small N
    elif N < 512:
        tn = 256
    else:
        tn = 512

    # M tiling: grow to raise arithmetic intensity (W streaming is the HBM
    # bottleneck), shrink to the per-generation VMEM budget.
    budget = _vmem_budget_bytes()
    tm = min(2048, _round_up(M, _SUBLANE))

    def _usage(tm_):
        u = 2 * tm_ * tk * x_bytes          # x tiles (double-buffered, f32 in)
        u += 2 * tk * tn * w_bytes          # W tiles (double-buffered)
        u += 2 * tm_ * tn * out_bytes       # out tiles (double-buffered)
        u += 2 * tn * 4                     # bias
        if gk > 1:
            u += tm_ * tn * 4               # f32 accumulator scratch
        return u

    while tm > 512 and _usage(tm) > budget:
        tm = max(512, tm // 2)
    gm = pl.cdiv(M, tm)
    gn = pl.cdiv(N, tn)

    # v7x megacore: make sure the parallel grid has >= 2 tiles when possible
    # (prefer splitting M so N tiles stay MXU-wide).
    if gm == 1 and gn == 1:
        if M >= 1024:
            tm = _round_up(pl.cdiv(M, 2), _SUBLANE)
            gm = pl.cdiv(M, tm)
        elif N >= 512:
            tn = _round_up(pl.cdiv(N, 2), _LANE)
            gn = pl.cdiv(N, tn)

    # Host-side prep: weight cast+transpose fuses into one XLA op; the
    # activation stays in its input dtype (cast happens in-kernel).
    x_in = x2d
    w_t = weight.astype(compute_dtype).T
    if Kp != K:
        # TODO(synk): rare (K > 2048 and K % 128 != 0) case still pads x and W along K.
        x_in = jnp.pad(x_in, ((0, 0), (0, Kp - K)))
        w_t = jnp.pad(w_t, ((0, Kp - K), (0, 0)))
    b = bias if bias is not None else jnp.zeros((N,), jnp.float32)
    b2 = b.astype(jnp.float32).reshape(1, N)

    vmem_limit = _vmem_limit_bytes(_usage(tm))
    cost = pl.CostEstimate(
        flops=2 * M * N * K,
        transcendentals=0,
        bytes_accessed=M * K * x_bytes + K * N * w_bytes + M * N * out_bytes + N * 4)

    if gk == 1:
        kernel = functools.partial(_matmul_bias_single_kernel,
                                   compute_dtype=compute_dtype)
        grid = (gm, gn)
        in_specs = [
            pl.BlockSpec((tm, tk), lambda i, j: (i, 0)),   # x
            pl.BlockSpec((tk, tn), lambda i, j: (0, j)),   # W^T
            pl.BlockSpec((1, tn), lambda i, j: (0, j)),    # bias
        ]
        out_specs = pl.BlockSpec((tm, tn), lambda i, j: (i, j))
        scratch_shapes = []
        semantics = ("parallel", "parallel")
    else:
        kernel = functools.partial(_matmul_bias_acc_kernel, k_axis=2,
                                   compute_dtype=compute_dtype)
        grid = (gm, gn, gk)
        in_specs = [
            pl.BlockSpec((tm, tk), lambda i, j, k: (i, k)),   # x
            pl.BlockSpec((tk, tn), lambda i, j, k: (k, j)),   # W^T
            pl.BlockSpec((1, tn), lambda i, j, k: (0, j)),    # bias
        ]
        out_specs = pl.BlockSpec((tm, tn), lambda i, j, k: (i, j))
        scratch_shapes = [pltpu.VMEM((tm, tn), jnp.float32)]
        semantics = ("parallel", "parallel", "arbitrary")

    return pl.pallas_call(
        kernel,
        out_shape=jax.ShapeDtypeStruct((M, N), out_dtype),
        grid_spec=pltpu.PrefetchScalarGridSpec(
            num_scalar_prefetch=0,
            grid=grid,
            in_specs=in_specs,
            out_specs=out_specs,
            scratch_shapes=scratch_shapes,
        ),
        compiler_params=pltpu.CompilerParams(
            dimension_semantics=semantics,
            vmem_limit_bytes=vmem_limit,
        ),
        cost_estimate=cost,
    )(x_in, w_t, b2)


# ---------------------------------------------------------------------------
# feature_dim == 1 : 1x1 conv on NCHW, computed as y[b] = W @ x[b] + bias
# (no NHWC transpose round trip; spatial axis stays lane-dense).
# ---------------------------------------------------------------------------
def _conv1x1_forward(x, weight, bias, out_dtype, compute_dtype):
    B, C, H, Wsp = x.shape
    N = weight.shape[0]
    K = C
    L = H * Wsp
    x_bytes = jnp.dtype(x.dtype).itemsize
    w_bytes = jnp.dtype(compute_dtype).itemsize
    out_bytes = jnp.dtype(out_dtype).itemsize

    tk, Kp = _k_tiling(K)
    gk = Kp // tk

    # N (out channels) is the sublane axis of the output; partial last block OK.
    tn = N if N <= 512 else 512
    gn = pl.cdiv(N, tn)

    # L (spatial) tiling: lane-dense output axis, partial last block allowed.
    tl = min(512, _round_up(L, _LANE))
    gl = pl.cdiv(L, tl)

    x_in = x.reshape(B, C, L)               # cheap reshape, no transpose, no cast
    w_in = weight.astype(compute_dtype)     # used as (N, K), no transpose
    if Kp != K:
        # TODO(synk): rare (C > 2048 and C % 128 != 0) case still pads x and W along K.
        x_in = jnp.pad(x_in, ((0, 0), (0, Kp - K), (0, 0)))
        w_in = jnp.pad(w_in, ((0, 0), (0, Kp - K)))
    b = bias if bias is not None else jnp.zeros((N,), jnp.float32)
    b2 = b.astype(jnp.float32).reshape(N, 1)

    usage = (2 * tn * tk * w_bytes + 2 * tk * tl * x_bytes
             + 2 * tn * tl * out_bytes + 2 * tn * 4
             + (tn * tl * 4 if gk > 1 else 0))
    vmem_limit = _vmem_limit_bytes(usage)
    cost = pl.CostEstimate(
        flops=2 * B * L * N * K,
        transcendentals=0,
        bytes_accessed=(B * K * L * x_bytes + N * K * w_bytes
                        + B * N * L * out_bytes + N * 4))

    # Grid order (B, l, n, k): the big activation block (b, k, l) is HELD
    # across the n axis, so it is fetched once; only the small W tile streams.
    if gk == 1:
        kernel = functools.partial(_matmul_bias_single_kernel,
                                   compute_dtype=compute_dtype)
        grid = (B, gl, gn)
        in_specs = [
            pl.BlockSpec((tn, tk), lambda b, l, n: (n, 0)),            # W
            pl.BlockSpec((None, tk, tl), lambda b, l, n: (b, 0, l)),   # x (batch squeezed)
            pl.BlockSpec((tn, 1), lambda b, l, n: (n, 0)),             # bias
        ]
        out_specs = pl.BlockSpec((None, tn, tl), lambda b, l, n: (b, n, l))
        scratch_shapes = []
        semantics = ("parallel", "parallel", "parallel")
    else:
        kernel = functools.partial(_matmul_bias_acc_kernel, k_axis=3,
                                   compute_dtype=compute_dtype)
        grid = (B, gl, gn, gk)
        in_specs = [
            pl.BlockSpec((tn, tk), lambda b, l, n, k: (n, k)),            # W
            pl.BlockSpec((None, tk, tl), lambda b, l, n, k: (b, k, l)),   # x
            pl.BlockSpec((tn, 1), lambda b, l, n, k: (n, 0)),             # bias
        ]
        out_specs = pl.BlockSpec((None, tn, tl), lambda b, l, n, k: (b, n, l))
        scratch_shapes = [pltpu.VMEM((tn, tl), jnp.float32)]
        semantics = ("parallel", "parallel", "parallel", "arbitrary")

    out = pl.pallas_call(
        kernel,
        out_shape=jax.ShapeDtypeStruct((B, N, L), out_dtype),
        grid_spec=pltpu.PrefetchScalarGridSpec(
            num_scalar_prefetch=0,
            grid=grid,
            in_specs=in_specs,
            out_specs=out_specs,
            scratch_shapes=scratch_shapes,
        ),
        compiler_params=pltpu.CompilerParams(
            dimension_semantics=semantics,
            vmem_limit_bytes=vmem_limit,
        ),
        cost_estimate=cost,
    )(w_in, x_in, b2)

    return out.reshape(B, N, H, Wsp)


# ---------------------------------------------------------------------------
# Public wrapper matching GeneralizedLinear.forward
# ---------------------------------------------------------------------------
@functools.partial(jax.jit, static_argnames=("feature_dim", "compute_dtype"))
def generalized_linear(x, weight, bias=None, feature_dim=-1,
                       compute_dtype=jnp.bfloat16):
    """Forward of GeneralizedLinear.

    feature_dim == -1 : x [..., in_features]            -> [..., out_features]
    feature_dim ==  1 : x [B, in_features, H, W] (NCHW) -> [B, out_features, H, W]

    weight: (out, in) (Linear) or (out, in, 1, 1) (Conv2d 1x1) — both accepted.
    bias:   (out,) or None
    compute_dtype: MXU operand dtype (default bf16; use jnp.float32 for parity
    with the f32 PyTorch reference).  Accumulation is always f32.
    """
    if weight.ndim == 4:  # Conv2d 1x1 weight layout
        weight = weight[:, :, 0, 0]
    out_features, in_features = weight.shape

    if feature_dim == -1:
        lead = x.shape[:-1]
        x2d = x.reshape(-1, in_features)
        y2d = _linear_forward(x2d, weight, bias, x.dtype, compute_dtype)
        return y2d.reshape(*lead, out_features)
    elif feature_dim == 1:
        assert x.shape[1] == in_features
        return _conv1x1_forward(x, weight, bias, x.dtype, compute_dtype)
    else:
        raise ValueError("Only first or last dimension supported")


def _init_params(key, in_features, out_features, use_bias=True):
    # PyTorch-style uniform(-1/sqrt(fan_in), 1/sqrt(fan_in)) init.
    kw, kb = jax.random.split(key)
    bound = 1.0 / jnp.sqrt(jnp.float32(in_features))
    weight = jax.random.uniform(
        kw, (out_features, in_features), jnp.float32, -bound, bound)
    bias = (
        jax.random.uniform(kb, (out_features,), jnp.float32, -bound, bound)
        if use_bias else None)
    return weight, bias


if __name__ == "__main__":
    key = jax.random.PRNGKey(0)
    k1, k2, k3, k4 = jax.random.split(key, 4)

    # bf16 operands / f32 accumulate -> looser tolerances than pure f32.
    ATOL = RTOL = 5e-2

    # ---- feature_dim = -1 (nn.Linear path) ----
    in_f, out_f = 32, 16
    x_lin = jax.random.normal(k1, (2, 8, in_f), jnp.float32)
    w_lin, b_lin = _init_params(k2, in_f, out_f, use_bias=True)
    y_lin = jax.block_until_ready(
        generalized_linear(x_lin, w_lin, b_lin, feature_dim=-1))
    ref_lin = x_lin @ w_lin.T + b_lin
    assert y_lin.shape == (2, 8, out_f)
    assert jnp.allclose(y_lin, ref_lin, atol=ATOL, rtol=RTOL)

    # no-bias variant
    y_nb = jax.block_until_ready(
        generalized_linear(x_lin, w_lin, None, feature_dim=-1))
    assert jnp.allclose(y_nb, x_lin @ w_lin.T, atol=ATOL, rtol=RTOL)

    # f32 parity path (compute_dtype flag)
    y_f32 = jax.block_until_ready(
        generalized_linear(x_lin, w_lin, b_lin, feature_dim=-1,
                           compute_dtype=jnp.float32))
    assert jnp.allclose(y_f32, ref_lin, atol=1e-4, rtol=1e-4)

    # ---- feature_dim = 1 (nn.Conv2d 1x1 path, NCHW input) ----
    in_c, out_c = 4, 8
    x_conv = jax.random.normal(k3, (2, in_c, 16, 16), jnp.float32)
    w_conv, b_conv = _init_params(k4, in_c, out_c, use_bias=True)
    y_conv = jax.block_until_ready(
        generalized_linear(x_conv, w_conv, b_conv, feature_dim=1))
    ref_conv = (
        jnp.einsum("bchw,oc->bohw", x_conv, w_conv) + b_conv[None, :, None, None])
    assert y_conv.shape == (2, out_c, 16, 16)
    assert jnp.allclose(y_conv, ref_conv, atol=ATOL, rtol=RTOL)

    print("KERNEL_OK")
</pallas_src>

<mosaic_0001>
module attributes {stable_mosaic.version = 11 : i64} {
  func.func @_matmul_bias_single_kernel(%arg0: i32, %arg1: i32, %arg2: memref<16x32xf32, #tpu.memory_space<vmem>>, %arg3: memref<32x16xbf16, #tpu.memory_space<vmem>>, %arg4: memref<1x16xf32, #tpu.memory_space<vmem>>, %arg5: memref<16x16xf32, #tpu.memory_space<vmem>>) attributes {dimension_semantics = [#tpu.dimension_semantics<parallel>, #tpu.dimension_semantics<parallel>], iteration_bounds = array<i64: 1, 1>, scalar_prefetch = 0 : i64, scratch_operands = 0 : i64, tpu.core_type = #tpu.core_type<tc>, window_params = [{transform_indices = @transform_0, window_bounds = array<i64: 16, 32>}, {transform_indices = @transform_1, window_bounds = array<i64: 32, 16>}, {transform_indices = @transform_2, window_bounds = array<i64: 1, 16>}, {transform_indices = @transform_3, window_bounds = array<i64: 16, 16>}]} {
    %c0 = arith.constant 0 : index
    %c0_0 = arith.constant 0 : index
    %0 = vector.load %arg2[%c0, %c0_0] : memref<16x32xf32, #tpu.memory_space<vmem>>, vector<16x32xf32>
    %1 = arith.truncf %0 : vector<16x32xf32> to vector<16x32xbf16>
    %c0_1 = arith.constant 0 : index
    %c0_2 = arith.constant 0 : index
    %2 = vector.load %arg3[%c0_1, %c0_2] : memref<32x16xbf16, #tpu.memory_space<vmem>>, vector<32x16xbf16>
    %cst = arith.constant dense<0.000000e+00> : vector<16x16xf32>
    %3 = tpu.matmul %1, %2, %cst {dimension_numbers = #tpu.dot_dimension_numbers<[1], [0], [0], [1], [0, 0, 1, 1], [], []>} : vector<16x32xbf16>, vector<32x16xbf16>, vector<16x16xf32> -> vector<16x16xf32>
    %c0_3 = arith.constant 0 : index
    %c0_4 = arith.constant 0 : index
    %4 = vector.load %arg4[%c0_3, %c0_4] : memref<1x16xf32, #tpu.memory_space<vmem>>, vector<1x16xf32>
    %5 = vector.broadcast %4 : vector<1x16xf32> to vector<16x16xf32>
    %6 = arith.addf %3, %5 : vector<16x16xf32>
    %c0_5 = arith.constant 0 : index
    %c0_6 = arith.constant 0 : index
    %7 = vector.load %arg5[%c0_5, %c0_6] : memref<16x16xf32, #tpu.memory_space<vmem>>, vector<16x16xf32>
    tpu.vector_store %arg5[%c0_5, %c0_6], %6 {strides = array<i32>} : memref<16x16xf32, #tpu.memory_space<vmem>>, vector<16x16xf32>,
    return
  }
  func.func @transform_0(%arg0: i32, %arg1: i32) -> (i32, i32) {
    %c0_i32 = arith.constant 0 : i32
    %c0_i32_0 = arith.constant 0 : i32
    return %arg0, %c0_i32 : i32, i32
  }
  func.func @transform_1(%arg0: i32, %arg1: i32) -> (i32, i32) {
    %c0_i32 = arith.constant 0 : i32
    %c0_i32_0 = arith.constant 0 : i32
    return %c0_i32, %arg1 : i32, i32
  }
  func.func @transform_2(%arg0: i32, %arg1: i32) -> (i32, i32) {
    %c0_i32 = arith.constant 0 : i32
    %c0_i32_0 = arith.constant 0 : i32
    return %c0_i32, %arg1 : i32, i32
  }
  func.func @transform_3(%arg0: i32, %arg1: i32) -> (i32, i32) {
    %c0_i32 = arith.constant 0 : i32
    return %arg0, %arg1 : i32, i32
  }
}

</mosaic_0001>

<llo_original>
// kernel: generalized_linear.1
$region0: #{generalized_linear.1}
  #allocation0 [shape = 'u32[]', space=smem, size = 0x4, offset = 0x4, fixed_abs, tag = 'smem constant byte address 0x4 - core index']
  #allocation1 [shape = 'u32[72,128]{1,0:T(1,128)}', space=vmem, size = 0x9000, scoped, tag = 'internal scratch']
  %s0 = inlined_call_operand.vmem [shape: f32[16,32], index: 0, kind: input, shape index: {}]
  %s1 = inlined_call_operand.vmem [shape: bf16[32,16], index: 1, kind: input, shape index: {}]
  %s2 = inlined_call_operand.vmem [shape: f32[1,16], index: 2, kind: input, shape index: {}]
  %s3 = inlined_call_operand.hbm [shape: f32[16,16], index: 3, kind: output, shape index: {}]
  %s4 = sld [smem:[#allocation0]]
  $region22: #{generalized_linear.1} parent=0
    _
  %s6 = ssub.s32 1, %s4
  %s7 = scalar_select 0, %s6, %s4
  $region1: #{generalized_linear.1} parent=0
    #allocation2 [shape = 'u8[8192]{0}', space=vmem, size = 0x2000, scoped, tag = 'output window, operand 0, single buffered']
    #allocation3 [shape = 's32[1]{0}', space=sflag, size = 0x4, scoped, tag = 'scoped memory for generalized_linear.1']
    %8 = vsyncpa [#allocation3], 0
    // Predicated region
    $region2: #{generalized_linear.1} parent=1 // pred_check
      _
    $region3: #{generalized_linear.1} parent=1 // pred_check_branch
      %10 = sbr.rel (0) target = $region5
    $region4: #{generalized_linear.1} parent=1 // pred_region
      _
    $region5: #{generalized_linear.1} parent=1 // pred_fallthru
      _
    // Predicated region
    $region6: #{generalized_linear.1} parent=1 // pred_check
      _
    $region7: #{generalized_linear.1} parent=1 // pred_check_branch
      %12 = sbr.rel (0) target = $region9
    $region8: #{generalized_linear.1} parent=1 // pred_region
      _
    $region9: #{generalized_linear.1} parent=1 // pred_fallthru
      _
    // Predicated region
    $region10: #{generalized_linear.1} parent=1 // pred_check
      _
    $region11: #{generalized_linear.1} parent=1 // pred_check_branch
      %14 = sbr.rel (0) target = $region13
    $region12: #{generalized_linear.1} parent=1 // pred_region
      _
    $region13: #{generalized_linear.1} parent=1 // pred_fallthru
      _
    %v16 = vld [vmem:[%s0] sm:$0xff]
    %v17 = vld [vmem:[%s0 + $0x8] sm:$0xff]
    %v18 = vpack.c.bf16 %v17, %v16
    %v19 = vld [vmem:[%s1] sm:$0xf]
    %v20 = vld [vmem:[%s1 + $0x4] sm:$0xf]
    %v21 = vld [vmem:[%s1 + $0x8] sm:$0xf]
    %v22 = vld [vmem:[%s1 + $0xc] sm:$0xf]
    %v23 = vld [vmem:[%s2] sm:$0x1]
    %v25 = vperm.slane %v23, 0
    %v31 = vunpack.c.l.b16 %v19
    %v32 = vunpack.c.l.b16 %v20
    %v33 = vunpack.c.l.b16 %v21
    %v34 = vunpack.c.l.b16 %v22
    %v35 = vpack.c.b16 %v32, %v31
    %v36 = vpack.c.b16 %v34, %v33
    %vm39 = vcmask 261120
    %v41 = vsel %vm39, %v18, 0
    %43 = vmatpush.bf16.msra.mxu0 0
    %44 = vmatpush.bf16.msra.mxu0 0
    %45 = vmatpush.bf16.msra.mxu0 0
    %46 = vmatpush.bf16.msra.mxu0 0
    %47 = vmatpush.bf16.msra.mxu0 0
    %48 = vmatpush.bf16.msra.mxu0 0
    %49 = vmatpush.bf16.msra.mxu0 %v36
    %50 = vmatpush.bf16.msra.mxu0 %v35
    %51 = vmatmul.bf16.gmra.mxu0 %v41
    %v52 = vpop.f32.mrf.mxu0
    %v53 = vadd.f32 %v25, %v52
    %v54 = vpop.f32.mrf.mxu0
    %v55 = vadd.f32 %v25, %v54
    %56 = vdwg.mxu0
    %vm57 = vcmask 130048
    %58 = vst.msk [vmem:[#allocation2] sm:$0xff] %vm57, %v53
    %59 = vst.msk [vmem:[#allocation2 + $0x8] sm:$0xff] %vm57, %v55
    // Predicated region
    $region14: #{generalized_linear.1} parent=1 // pred_check
      _
    $region15: #{generalized_linear.1} parent=1 // pred_check_branch
      %61 = sbr.rel (0) target = $region17
    $region16: #{generalized_linear.1} parent=1 // pred_region
      %63 = vsyncadd [#allocation3], 0
      %s64 = sshll.u32 [#allocation2], 4
      %s65 = int_to_ptr.vmem [resolvable:$true] %s64
      %s66 = sshll.u32 %s3, 4
      %s67 = int_to_ptr.hbm [resolvable:$true] %s66
      %72 = dma.vmem_to_hbm [thread:$0]  %s65, 256, %s67, [#allocation3], 128, 128, 8
    $region17: #{generalized_linear.1} parent=1 // pred_fallthru
      _
    // Predicated region
    $region18: #{generalized_linear.1} parent=1 // pred_check
      _
    $region19: #{generalized_linear.1} parent=1 // pred_check_branch
      %74 = sbr.rel (0) target = $region21
    $region20: #{generalized_linear.1} parent=1 // pred_region
      %76 = dma.done [#allocation3], 256
    $region21: #{generalized_linear.1} parent=1 // pred_fallthru
      _
    %77 = vsyncpa [#allocation3], 1

</llo_original>
